<compile_context>
chip_gen: v7x
topology: tpu7x:2x2x1
jax: 0.10.0
libtpu: 0.0.40
codegen_flags: <defaults>
</compile_context>

<pallas_src>
import jax
import jax.numpy as jnp
from jax.experimental import pallas as pl
from jax.experimental.pallas import tpu as pltpu


def _expert_parallel_kernel(x_ref, w1_ref, b1_ref, w2_ref, b2_ref, o_ref, acc_ref):
    """One grid step = (expert j, token-tile m, hidden-contraction tile h).

    x_ref : (Rm*B, 1, Sc, D) f32  -- tokens of Rm source ranks destined for expert j
    w1_ref: (D, Ht)  bf16         -- columns [h*Ht:(h+1)*Ht] of W1[j]
    b1_ref: (1, Ht)  f32
    w2_ref: (Ht, D)  bf16         -- rows    [h*Ht:(h+1)*Ht] of W2[j]
    b2_ref: (1, D)   f32
    o_ref : (Rm, 1, B*Sc, D) f32  -- out view [m*Rm:(m+1)*Rm, j, :, :]
    acc_ref: (Rm*B*Sc, D) f32 VMEM accumulator, resident across the h axis.
    """
    h_idx = pl.program_id(2)

    @pl.when(h_idx == 0)
    def _init():
        acc_ref[...] = jnp.zeros_like(acc_ref)

    RmB, _, Sc, D = x_ref.shape
    M = RmB * Sc

    # Layout no-op flatten (Sc % 8 == 0, D % 128 == 0, f32); cast activations
    # to bf16 so both matmuls run at native MXU rate with f32 accumulation.
    x = x_ref[...].reshape(M, D).astype(jnp.bfloat16)

    # First matmul: full-D contraction, restricted to this step's H slab.
    hblk = jnp.dot(x, w1_ref[...], preferred_element_type=jnp.float32)
    hblk = jnp.maximum(hblk + b1_ref[...], 0.0)

    # Partial second matmul: contract this H slab into the f32 accumulator.
    acc_ref[...] += jnp.dot(hblk.astype(jnp.bfloat16), w2_ref[...],
                            preferred_element_type=jnp.float32)

    @pl.when(h_idx == pl.num_programs(2) - 1)
    def _finalize():
        y = acc_ref[...] + b2_ref[...]
        Rm, _, BSc, Do = o_ref.shape
        o_ref[...] = y.reshape(Rm, 1, BSc, Do).astype(o_ref.dtype)


def _physical_vmem_bytes():
    """Per-TensorCore VMEM capacity; conservative (v7x = 64 MiB) fallback."""
    try:
        info = pltpu.get_tpu_info()
        return int(getattr(info, "vmem_capacity_bytes", 64 << 20))
    except Exception:
        return 64 << 20


def _pick_h_tile(D, H, weight_budget_bytes):
    """Largest H contraction tile that divides H, is 256-aligned when possible
    (full v6e/v7x MXU width; 128 already fills v5e's 4x128 MXU), and keeps the
    double-buffered bf16 W1+W2 tiles inside the VMEM weight budget."""
    step = 256 if H % 256 == 0 else 128
    best = None
    t = step
    while t <= H:
        if H % t == 0 and 2 * (2 * D * t * 2) <= weight_budget_bytes:
            best = t
        t += step
    return best if best is not None else H


def _pick_m_ranks(E, B, Sc, target_rows=256):
    """Token tile = whole source ranks (contiguous, lane-dense writeback).
    Grow toward >= target_rows MXU rows per step, but keep >= 2 token tiles
    per expert so the software pipeline has something to prefetch."""
    rows_per_rank = B * Sc
    m = 1
    while (m * rows_per_rank < target_rows
           and E % (2 * m) == 0
           and E // (2 * m) >= 2):
        m *= 2
    return m


def expert_parallel_forward(x, w1, b1, w2, b2, *, m_ranks=None, h_tile=None):
    """All E ranks of torch ExpertParallel.forward evaluated on one device.

    x : (E, B, S, D) f32; w1: (E, D, H); b1: (E, 1, H); w2: (E, H, D); b2: (E, 1, D)
    returns (E, E*B, S//E, D) f32.
    """
    E, B, S, D = x.shape
    H = w1.shape[-1]
    assert S % E == 0, "seq_len must be divisible by expert_degree"
    Sc = S // E
    assert D % 128 == 0 and Sc % 8 == 0, "lane/sublane alignment assumption"

    phys_vmem = _physical_vmem_bytes()

    if h_tile is None:
        h_tile = _pick_h_tile(D, H, weight_budget_bytes=phys_vmem // 3)
    assert H % h_tile == 0 and (h_tile % 128 == 0 or h_tile == H)
    n_h = H // h_tile

    if m_ranks is None:
        m_ranks = _pick_m_ranks(E, B, Sc)
    assert E % m_ranks == 0, "token tile must cover whole source ranks"
    n_m = E // m_ranks
    M_tile = m_ranks * B * Sc

    # Free reshape: merge (E, B), split S -> (E*B, E, Sc, D).  Axis 1 indexes
    # the destination expert (first all_to_all); axis 0 = (source rank, batch).
    x2 = x.reshape(E * B, E, Sc, D)

    # Weights dominate HBM traffic -> bf16 in HBM; biases stay f32 (added to
    # the f32 accumulator).
    w1b = w1.astype(jnp.bfloat16)
    w2b = w2.astype(jnp.bfloat16)
    b1f = b1.astype(jnp.float32)
    b2f = b2.astype(jnp.float32)

    # Grid = (expert j, token tile m, hidden contraction tile h); h last.
    grid = (E, n_m, n_h)
    in_specs = [
        # Tokens for (expert j, rank-tile m); index independent of h so the
        # block stays resident across the whole contraction (no re-DMA).
        pl.BlockSpec((m_ranks * B, 1, Sc, D), lambda j, m, h: (m, j, 0, 0)),
        # W1[j][:, h*Ht:(h+1)*Ht] / b1[j][:, h*Ht:...] depend only on (j, h).
        pl.BlockSpec((None, D, h_tile), lambda j, m, h: (j, 0, h)),
        pl.BlockSpec((None, 1, h_tile), lambda j, m, h: (j, 0, h)),
        # W2[j][h*Ht:(h+1)*Ht, :]
        pl.BlockSpec((None, h_tile, D), lambda j, m, h: (j, h, 0)),
        # b2[j] : expert-only (fetched once per expert).
        pl.BlockSpec((None, 1, D), lambda j, m, h: (j, 0, 0)),
    ]
    # Contiguous, lane-dense output slab (whole source ranks per m tile);
    # index independent of h -> written back only after the h loop finishes.
    out_specs = pl.BlockSpec((m_ranks, 1, B * Sc, D), lambda j, m, h: (m, j, 0, 0))

    # Double-buffered tile footprint -> vmem_limit_bytes, clamped to 3/4 of
    # the chip's physical VMEM (64 MiB v7x, 128 MiB v5e/v6e).
    tile_bytes = (M_tile * D * 4          # x tile (f32)
                  + D * h_tile * 2        # W1 tile (bf16)
                  + h_tile * 4            # b1 tile (f32)
                  + h_tile * D * 2        # W2 tile (bf16)
                  + D * 4                 # b2 tile (f32)
                  + M_tile * D * 4)       # out tile (f32)
    needed = (2 * tile_bytes              # double-buffered input/output tiles
              + M_tile * D * 4            # f32 accumulator scratch
              + 2 * M_tile * h_tile * 4)  # headroom for the hidden slab
    vmem_limit = int(min(max(2 * needed, 32 << 20), phys_vmem * 3 // 4))

    flops = 4 * E * B * S * D * H  # two matmuls over E*B*S tokens total
    bytes_accessed = (x.size * 4                   # f32 activations in
                      + E * B * S * D * 4          # f32 output
                      + n_m * 2 * E * D * H * 2    # bf16 W1+W2, re-streamed per token tile
                      + E * (n_m * H + D) * 4)     # f32 biases
    cost = pl.CostEstimate(flops=flops, transcendentals=0,
                           bytes_accessed=bytes_accessed)

    out = pl.pallas_call(
        _expert_parallel_kernel,
        out_shape=jax.ShapeDtypeStruct((E, E, B * Sc, D), jnp.float32),
        grid_spec=pltpu.PrefetchScalarGridSpec(
            num_scalar_prefetch=0,
            grid=grid,
            in_specs=in_specs,
            out_specs=out_specs,
            scratch_shapes=[pltpu.VMEM((M_tile, D), jnp.float32)],
        ),
        compiler_params=pltpu.CompilerParams(
            # j and m are independent -> shard across v7x's two TensorCores;
            # h is the contraction -> sequential ("arbitrary"), kept last.
            dimension_semantics=("parallel", "parallel", "arbitrary"),
            vmem_limit_bytes=vmem_limit,
        ),
        cost_estimate=cost,
    )(x2, w1b, b1f, w2b, b2f)

    # Free reshape back to the torch layout: out[r, j*B + b, t, d].
    return out.reshape(E, E * B, Sc, D)


def _reference(x, w1, b1, w2, b2):
    """Pure-JAX emulation of the torch module across all E ranks, mirroring the
    kernel's bf16-operand / f32-accumulation arithmetic."""
    E, B, S, D = x.shape
    Sc = S // E
    f32 = jnp.float32
    xb = x.astype(jnp.bfloat16).astype(f32)
    w1b = w1.astype(jnp.bfloat16).astype(f32)
    w2b = w2.astype(jnp.bfloat16).astype(f32)
    # first all_to_all + cat(dim=1): expert_in[j, b, r*Sc+t] = x[r, b, j*Sc+t]
    xr = xb.reshape(E, B, E, Sc, D)
    expert_in = jnp.transpose(xr, (2, 1, 0, 3, 4)).reshape(E, B, S, D)
    h = jnp.maximum(jnp.einsum("jbsd,jdh->jbsh", expert_in, w1b)
                    + b1[:, None, :, :], 0.0)
    h = h.astype(jnp.bfloat16).astype(f32)
    y = jnp.einsum("jbsh,jhd->jbsd", h, w2b) + b2[:, None, :, :]
    # second all_to_all + cat(dim=0): out[r, j*B+b, t] = y[j, b, r*Sc+t]
    yr = y.reshape(E, B, E, Sc, D)
    return jnp.transpose(yr, (2, 0, 1, 3, 4)).reshape(E, E * B, Sc, D)


if __name__ == "__main__":
    # expert_degree, local batch, seq_len, d_model, d_ff
    E, B, S, D, H = 2, 2, 16, 128, 512
    key = jax.random.PRNGKey(0)
    kx, k1, k2, k3, k4 = jax.random.split(key, 5)
    x  = jax.random.normal(kx, (E, B, S, D), dtype=jnp.float32)
    w1 = jax.random.normal(k1, (E, D, H), dtype=jnp.float32) * 0.02
    b1 = jax.random.normal(k2, (E, 1, H), dtype=jnp.float32) * 0.02
    w2 = jax.random.normal(k3, (E, H, D), dtype=jnp.float32) * 0.02
    b2 = jax.random.normal(k4, (E, 1, D), dtype=jnp.float32) * 0.02

    # Explicit small tiles so the toy shapes exercise the full (j, m, h) grid,
    # the f32 VMEM accumulator and the pl.when init/finalize paths
    # (grid = (2 experts, 2 token tiles, 2 H tiles) = 8 steps).
    out = expert_parallel_forward(x, w1, b1, w2, b2, m_ranks=1, h_tile=256)
    out = jax.block_until_ready(out)

    ref = _reference(x, w1, b1, w2, b2)
    assert out.shape == (E, E * B, S // E, D), out.shape
    if not jnp.allclose(out, ref, atol=1e-3, rtol=1e-3):
        err = float(jnp.max(jnp.abs(out - ref)))
        raise AssertionError(f"Pallas kernel mismatch vs reference, max|diff|={err}")
    print("KERNEL_OK")
</pallas_src>

<mosaic_0001>
module attributes {stable_mosaic.version = 11 : i64} {
  func.func @_expert_parallel_kernel(%arg0: i32, %arg1: i32, %arg2: i32, %arg3: memref<2x1x8x128xf32, #tpu.memory_space<vmem>>, %arg4: memref<1x128x256xbf16, #tpu.memory_space<vmem>>, %arg5: memref<1x1x256xf32, #tpu.memory_space<vmem>>, %arg6: memref<1x256x128xbf16, #tpu.memory_space<vmem>>, %arg7: memref<1x1x128xf32, #tpu.memory_space<vmem>>, %arg8: memref<1x1x16x128xf32, #tpu.memory_space<vmem>>, %arg9: memref<16x128xf32, #tpu.memory_space<vmem>>) attributes {dimension_semantics = [#tpu.dimension_semantics<parallel>, #tpu.dimension_semantics<parallel>, #tpu.dimension_semantics<arbitrary>], iteration_bounds = array<i64: 2, 2, 2>, scalar_prefetch = 0 : i64, scratch_operands = 1 : i64, tpu.core_type = #tpu.core_type<tc>, window_params = [{transform_indices = @transform_0, window_bounds = array<i64: 2, 1, 8, 128>}, {transform_indices = @transform_1, window_bounds = array<i64: 1, 128, 256>}, {transform_indices = @transform_2, window_bounds = array<i64: 1, 1, 256>}, {transform_indices = @transform_3, window_bounds = array<i64: 1, 256, 128>}, {transform_indices = @transform_4, window_bounds = array<i64: 1, 1, 128>}, {transform_indices = @transform_5, window_bounds = array<i64: 1, 1, 16, 128>}]} {
    %c0_i32 = arith.constant 0 : i32
    %0 = arith.cmpi eq, %arg2, %c0_i32 : i32
    %1 = arith.extui %0 : i1 to i32
    %c0_i32_0 = arith.constant 0 : i32
    %2 = arith.cmpi ne, %1, %c0_i32_0 : i32
    scf.if %2 {
      %cst_20 = arith.constant 0.000000e+00 : f32
      %25 = vector.broadcast %cst_20 : f32 to vector<16x128xf32>
      %c0_21 = arith.constant 0 : index
      %c0_22 = arith.constant 0 : index
      %26 = vector.load %arg9[%c0_21, %c0_22] : memref<16x128xf32, #tpu.memory_space<vmem>>, vector<16x128xf32>
      tpu.vector_store %arg9[%c0_21, %c0_22], %25 {strides = array<i32>} : memref<16x128xf32, #tpu.memory_space<vmem>>, vector<16x128xf32>,
    } else {
    }
    %c0 = arith.constant 0 : index
    %c0_1 = arith.constant 0 : index
    %c0_2 = arith.constant 0 : index
    %c0_3 = arith.constant 0 : index
    %3 = vector.load %arg3[%c0, %c0_1, %c0_2, %c0_3] : memref<2x1x8x128xf32, #tpu.memory_space<vmem>>, vector<2x1x8x128xf32>
    %4 = vector.shape_cast %3 : vector<2x1x8x128xf32> to vector<16x128xf32>
    %5 = arith.truncf %4 : vector<16x128xf32> to vector<16x128xbf16>
    %c0_4 = arith.constant 0 : index
    %c0_5 = arith.constant 0 : index
    %c0_6 = arith.constant 0 : index
    %6 = vector.load %arg4[%c0_4, %c0_5, %c0_6] : memref<1x128x256xbf16, #tpu.memory_space<vmem>>, vector<1x128x256xbf16>
    %7 = vector.shape_cast %6 : vector<1x128x256xbf16> to vector<128x256xbf16>
    %cst = arith.constant dense<0.000000e+00> : vector<16x256xf32>
    %8 = tpu.matmul %5, %7, %cst {dimension_numbers = #tpu.dot_dimension_numbers<[1], [0], [0], [1], [0, 0, 1, 1], [], []>} : vector<16x128xbf16>, vector<128x256xbf16>, vector<16x256xf32> -> vector<16x256xf32>
    %c0_7 = arith.constant 0 : index
    %c0_8 = arith.constant 0 : index
    %c0_9 = arith.constant 0 : index
    %9 = vector.load %arg5[%c0_7, %c0_8, %c0_9] : memref<1x1x256xf32, #tpu.memory_space<vmem>>, vector<1x1x256xf32>
    %10 = vector.shape_cast %9 : vector<1x1x256xf32> to vector<1x256xf32>
    %11 = vector.broadcast %10 : vector<1x256xf32> to vector<16x256xf32>
    %12 = arith.addf %8, %11 : vector<16x256xf32>
    %cst_10 = arith.constant 0.000000e+00 : f32
    %13 = vector.broadcast %cst_10 : f32 to vector<16x256xf32>
    %14 = arith.maximumf %12, %13 : vector<16x256xf32>
    %c0_11 = arith.constant 0 : index
    %c0_12 = arith.constant 0 : index
    %15 = vector.load %arg9[%c0_11, %c0_12] : memref<16x128xf32, #tpu.memory_space<vmem>>, vector<16x128xf32>
    %16 = arith.truncf %14 : vector<16x256xf32> to vector<16x256xbf16>
    %c0_13 = arith.constant 0 : index
    %c0_14 = arith.constant 0 : index
    %c0_15 = arith.constant 0 : index
    %17 = vector.load %arg6[%c0_13, %c0_14, %c0_15] : memref<1x256x128xbf16, #tpu.memory_space<vmem>>, vector<1x256x128xbf16>
    %18 = vector.shape_cast %17 : vector<1x256x128xbf16> to vector<256x128xbf16>
    %cst_16 = arith.constant dense<0.000000e+00> : vector<16x128xf32>
    %19 = tpu.matmul %16, %18, %cst_16 {dimension_numbers = #tpu.dot_dimension_numbers<[1], [0], [0], [1], [0, 0, 1, 1], [], []>} : vector<16x256xbf16>, vector<256x128xbf16>, vector<16x128xf32> -> vector<16x128xf32>
    %20 = arith.addf %15, %19 : vector<16x128xf32>
    %c0_17 = arith.constant 0 : index
    %c0_18 = arith.constant 0 : index
    %21 = vector.load %arg9[%c0_17, %c0_18] : memref<16x128xf32, #tpu.memory_space<vmem>>, vector<16x128xf32>
    tpu.vector_store %arg9[%c0_17, %c0_18], %20 {strides = array<i32>} : memref<16x128xf32, #tpu.memory_space<vmem>>, vector<16x128xf32>,
    %c1_i32 = arith.constant 1 : i32
    %22 = arith.cmpi eq, %arg2, %c1_i32 : i32
    %23 = arith.extui %22 : i1 to i32
    %c0_i32_19 = arith.constant 0 : i32
    %24 = arith.cmpi ne, %23, %c0_i32_19 : i32
    scf.if %24 {
      %c0_20 = arith.constant 0 : index
      %c0_21 = arith.constant 0 : index
      %25 = vector.load %arg9[%c0_20, %c0_21] : memref<16x128xf32, #tpu.memory_space<vmem>>, vector<16x128xf32>
      %c0_22 = arith.constant 0 : index
      %c0_23 = arith.constant 0 : index
      %c0_24 = arith.constant 0 : index
      %26 = vector.load %arg7[%c0_22, %c0_23, %c0_24] : memref<1x1x128xf32, #tpu.memory_space<vmem>>, vector<1x1x128xf32>
      %27 = vector.shape_cast %26 : vector<1x1x128xf32> to vector<1x128xf32>
      %28 = vector.broadcast %27 : vector<1x128xf32> to vector<16x128xf32>
      %29 = arith.addf %25, %28 : vector<16x128xf32>
      %30 = vector.shape_cast %29 : vector<16x128xf32> to vector<1x1x16x128xf32>
      %c0_25 = arith.constant 0 : index
      %c0_26 = arith.constant 0 : index
      %c0_27 = arith.constant 0 : index
      %c0_28 = arith.constant 0 : index
      %31 = vector.load %arg8[%c0_25, %c0_26, %c0_27, %c0_28] : memref<1x1x16x128xf32, #tpu.memory_space<vmem>>, vector<1x1x16x128xf32>
      tpu.vector_store %arg8[%c0_25, %c0_26, %c0_27, %c0_28], %30 {strides = array<i32>} : memref<1x1x16x128xf32, #tpu.memory_space<vmem>>, vector<1x1x16x128xf32>,
    } else {
    }
    return
  }
  func.func @transform_0(%arg0: i32, %arg1: i32, %arg2: i32) -> (i32, i32, i32, i32) {
    %c0_i32 = arith.constant 0 : i32
    %c0_i32_0 = arith.constant 0 : i32
    %c0_i32_1 = arith.constant 0 : i32
    return %arg1, %arg0, %c0_i32, %c0_i32_0 : i32, i32, i32, i32
  }
  func.func @transform_1(%arg0: i32, %arg1: i32, %arg2: i32) -> (i32, i32, i32) {
    %c0_i32 = arith.constant 0 : i32
    %c0_i32_0 = arith.constant 0 : i32
    return %arg0, %c0_i32, %arg2 : i32, i32, i32
  }
  func.func @transform_2(%arg0: i32, %arg1: i32, %arg2: i32) -> (i32, i32, i32) {
    %c0_i32 = arith.constant 0 : i32
    %c0_i32_0 = arith.constant 0 : i32
    return %arg0, %c0_i32, %arg2 : i32, i32, i32
  }
  func.func @transform_3(%arg0: i32, %arg1: i32, %arg2: i32) -> (i32, i32, i32) {
    %c0_i32 = arith.constant 0 : i32
    %c0_i32_0 = arith.constant 0 : i32
    return %arg0, %arg2, %c0_i32 : i32, i32, i32
  }
  func.func @transform_4(%arg0: i32, %arg1: i32, %arg2: i32) -> (i32, i32, i32) {
    %c0_i32 = arith.constant 0 : i32
    %c0_i32_0 = arith.constant 0 : i32
    %c0_i32_1 = arith.constant 0 : i32
    return %arg0, %c0_i32, %c0_i32_0 : i32, i32, i32
  }
  func.func @transform_5(%arg0: i32, %arg1: i32, %arg2: i32) -> (i32, i32, i32, i32) {
    %c0_i32 = arith.constant 0 : i32
    %c0_i32_0 = arith.constant 0 : i32
    %c0_i32_1 = arith.constant 0 : i32
    return %arg1, %arg0, %c0_i32, %c0_i32_0 : i32, i32, i32, i32
  }
}

</mosaic_0001>

<llo_original>
// kernel: tpu_custom_call.1
$region0: #{tpu_custom_call.1}
  #allocation0 [shape = 'u32[]', space=smem, size = 0x4, offset = 0x4, fixed_abs, tag = 'smem constant byte address 0x4 - core index']
  #allocation1 [shape = 'u32[144,128]{1,0:T(1,128)}', space=vmem, size = 0x12000, scoped, tag = 'internal scratch']
  #allocation2 [shape = 'f32[16,128]{1,0:T(8,128)}', space=vmem, size = 0x2000, scoped, tag = 'scratch operand']
  %s0 = inlined_call_operand.hbm [shape: f32[4,2,8,128], index: 0, kind: input, shape index: {}]
  %s1 = inlined_call_operand.hbm [shape: bf16[2,128,512], index: 1, kind: input, shape index: {}]
  %s2 = inlined_call_operand.hbm [shape: f32[2,1,512], index: 2, kind: input, shape index: {}]
  %s3 = inlined_call_operand.hbm [shape: bf16[2,512,128], index: 3, kind: input, shape index: {}]
  %s4 = inlined_call_operand.vmem [shape: f32[2,1,128], index: 4, kind: input, shape index: {}]
  %s5 = inlined_call_operand.hbm [shape: f32[2,2,16,128], index: 5, kind: output, shape index: {}]
  %s6 = sld [smem:[#allocation0]]
  $region77: #{tpu_custom_call.1} parent=0
    _
  %s8 = ssub.s32 1, %s6
  %s9 = scalar_select 0, %s8, %s6
  $region1: #{tpu_custom_call.1} parent=0
    #allocation3 [shape = 'u8[16384]{0}', space=vmem, size = 0x4000, scoped, tag = 'input window, operand 0']
    #allocation4 [shape = 's32[2]{0}', space=sflag, size = 0x8, scoped, tag = 'scoped memory for tpu_custom_call.1']
    #allocation5 [shape = 's32[2]{0}', space=sflag, size = 0x8, scoped, tag = 'scoped memory for tpu_custom_call.1']
    #allocation6 [shape = 'u8[131072]{0}', space=vmem, size = 0x20000, scoped, tag = 'input window, operand 1']
    #allocation7 [shape = 's32[2]{0}', space=sflag, size = 0x8, scoped, tag = 'scoped memory for tpu_custom_call.1']
    #allocation8 [shape = 'u8[2048]{0}', space=vmem, size = 0x800, scoped, tag = 'input window, operand 2']
    #allocation9 [shape = 'u8[131072]{0}', space=vmem, size = 0x20000, scoped, tag = 'input window, operand 3']
    #allocation10 [shape = 's32[2]{0}', space=sflag, size = 0x8, scoped, tag = 'scoped memory for tpu_custom_call.1']
    #allocation11 [shape = 'u8[16384]{0}', space=vmem, size = 0x4000, scoped, tag = 'output window, operand 0']
    %10 = vsyncpa [#allocation4], 0
    %s11 = scalar_lea.sflag [#allocation4], 1
    %12 = vsyncpa %s11, 0
    %13 = vsyncpa [#allocation7], 0
    %s14 = scalar_lea.sflag [#allocation7], 1
    %15 = vsyncpa %s14, 0
    %16 = vsyncpa [#allocation10], 0
    %s17 = scalar_lea.sflag [#allocation10], 1
    %18 = vsyncpa %s17, 0
    %19 = vsyncpa [#allocation5], 0
    %s20 = scalar_lea.sflag [#allocation5], 1
    %21 = vsyncpa %s20, 0
    loop: start=0, step=1, limit=10
    $region2: #{tpu_custom_call.1} parent=1 // loop_pre_header
      _
    $region3: #{tpu_custom_call.1} parent=1 // loop_header
      %s23 = sphi 0, %s27
      %p24 = scmp.ge.s32.totalorder %s23, 10
      %s30 = sphi 0, %s49
      %s31 = sphi 0, %s45
      %s32 = sphi 0, %s41
      %s33 = sphi 0, %s30
      %s34 = sphi 0, %s31
      %s35 = sphi 0, %s32
      %s36 = sphi 0, %s33
      %s37 = sphi 0, %s34
      %s38 = sphi 0, %s35
      %s54 = sphi 0, %s56
      %s57 = sphi 0, %s54
      %s58 = sphi 0, %s57
      %s74 = sphi 0, %s58
      %s82 = sphi 0, %s84
      %s85 = sphi 0, %s82
      %s86 = sphi 0, %s85
      %s102 = sphi 0, %s86
      %s110 = sphi 0, %s112
      %s113 = sphi 0, %s110
      %s114 = sphi 0, %s113
      %s130 = sphi 0, %s114
      %s138 = sphi 0, %s140
      %s141 = sphi 0, %s138
      %s142 = sphi 0, %s141
      %s158 = sphi 0, %s142
      %s164 = sphi 0, %s166
      %s167 = sphi 0, %s164
      %s168 = sphi 0, %s167
      %s184 = sphi 0, %s168
      %s192 = sphi 0, %s194
      %s195 = sphi 0, %s192
      %s196 = sphi 0, %s195
      %s212 = sphi 0, %s196
    $region4: #{tpu_custom_call.1} parent=1 // loop_header_branch
      %26 = sbr.rel (%p24) target = $region8
    $region5: #{tpu_custom_call.1} parent=1 // loop_body
      %s28 = ssub.s32 %s23, 1
      %s29 = ssub.s32 %s23, 2
      %s39 = sadd.s32 1, %s32
      %p40 = scmp.ge.s32.totalorder %s39, 2
      %s41 = scalar_select %p40, 0, %s39
      %s42 = sadd.s32 1, %s31
      %s43 = scalar_select %p40, %s42, %s31
      %p44 = scmp.ge.s32.totalorder %s43, 2
      %s45 = scalar_select %p44, 0, %s43
      %s46 = sadd.s32 1, %s30
      %s47 = scalar_select %p44, %s46, %s30
      %p48 = scmp.ge.s32.totalorder %s47, 2
      %s49 = scalar_select %p48, 0, %s47
      %s50 = ssub.s32 %s31, %s45
      %s51 = ssub.s32 %s30, %s49
      %s52 = sor.u32 %s50, %s51
      %p53 = scmp.eq.s32.totalorder %s52, 0
      %s55 = sadd.s32 %s54, 1
      %s56 = scalar_select %p53, %s54, %s55
      %p59 = pneg %p53
      %p60 = scmp.eq.s32.totalorder %s23, 7
      %p61 = por %p59, %p60
      %p62 = scmp.ne.s32.totalorder %s54, %s57
      %p63 = scmp.eq.s32.totalorder %s23, 0
      %p64 = por %p62, %p63
      %p65 = scmp.ne.s32.totalorder %s54, %s57
      %p66 = scmp.eq.s32.totalorder %s28, 7
      %p67 = por %p65, %p66
      %p68 = scmp.ne.s32.totalorder %s57, %s58
      %p69 = scmp.eq.s32.totalorder %s28, 0
      %p70 = por %p68, %p69
      %p71 = scmp.ne.s32.totalorder %s57, %s58
      %p72 = scmp.eq.s32.totalorder %s29, 7
      %p73 = por %p71, %p72
      %p75 = scmp.ne.s32.totalorder %s58, %s74
      %p76 = scmp.eq.s32.totalorder %s29, 0
      %p77 = por %p75, %p76
      %s78 = ssub.s32 %s30, %s49
      %s79 = ssub.s32 %s32, %s41
      %s80 = sor.u32 %s78, %s79
      %p81 = scmp.eq.s32.totalorder %s80, 0
      %s83 = sadd.s32 %s82, 1
      %s84 = scalar_select %p81, %s82, %s83
      %p87 = pneg %p81
      %p88 = scmp.eq.s32.totalorder %s23, 7
      %p89 = por %p87, %p88
      %p90 = scmp.ne.s32.totalorder %s82, %s85
      %p91 = scmp.eq.s32.totalorder %s23, 0
      %p92 = por %p90, %p91
      %p93 = scmp.ne.s32.totalorder %s82, %s85
      %p94 = scmp.eq.s32.totalorder %s28, 7
      %p95 = por %p93, %p94
      %p96 = scmp.ne.s32.totalorder %s85, %s86
      %p97 = scmp.eq.s32.totalorder %s28, 0
      %p98 = por %p96, %p97
      %p99 = scmp.ne.s32.totalorder %s85, %s86
      %p100 = scmp.eq.s32.totalorder %s29, 7
      %p101 = por %p99, %p100
      %p103 = scmp.ne.s32.totalorder %s86, %s102
      %p104 = scmp.eq.s32.totalorder %s29, 0
      %p105 = por %p103, %p104
      %s106 = ssub.s32 %s30, %s49
      %s107 = ssub.s32 %s32, %s41
      %s108 = sor.u32 %s106, %s107
      %p109 = scmp.eq.s32.totalorder %s108, 0
      %s111 = sadd.s32 %s110, 1
      %s112 = scalar_select %p109, %s110, %s111
      %p115 = pneg %p109
      %p116 = scmp.eq.s32.totalorder %s23, 7
      %p117 = por %p115, %p116
      %p118 = scmp.ne.s32.totalorder %s110, %s113
      %p119 = scmp.eq.s32.totalorder %s23, 0
      %p120 = por %p118, %p119
      %p121 = scmp.ne.s32.totalorder %s110, %s113
      %p122 = scmp.eq.s32.totalorder %s28, 7
      %p123 = por %p121, %p122
      %p124 = scmp.ne.s32.totalorder %s113, %s114
      %p125 = scmp.eq.s32.totalorder %s28, 0
      %p126 = por %p124, %p125
      %p127 = scmp.ne.s32.totalorder %s113, %s114
      %p128 = scmp.eq.s32.totalorder %s29, 7
      %p129 = por %p127, %p128
      %p131 = scmp.ne.s32.totalorder %s114, %s130
      %p132 = scmp.eq.s32.totalorder %s29, 0
      %p133 = por %p131, %p132
      %s134 = ssub.s32 %s30, %s49
      %s135 = ssub.s32 %s32, %s41
      %s136 = sor.u32 %s134, %s135
      %p137 = scmp.eq.s32.totalorder %s136, 0
      %s139 = sadd.s32 %s138, 1
      %s140 = scalar_select %p137, %s138, %s139
      %p143 = pneg %p137
      %p144 = scmp.eq.s32.totalorder %s23, 7
      %p145 = por %p143, %p144
      %p146 = scmp.ne.s32.totalorder %s138, %s141
      %p147 = scmp.eq.s32.totalorder %s23, 0
      %p148 = por %p146, %p147
      %p149 = scmp.ne.s32.totalorder %s138, %s141
      %p150 = scmp.eq.s32.totalorder %s28, 7
      %p151 = por %p149, %p150
      %p152 = scmp.ne.s32.totalorder %s141, %s142
      %p153 = scmp.eq.s32.totalorder %s28, 0
      %p154 = por %p152, %p153
      %p155 = scmp.ne.s32.totalorder %s141, %s142
      %p156 = scmp.eq.s32.totalorder %s29, 7
      %p157 = por %p155, %p156
      %p159 = scmp.ne.s32.totalorder %s142, %s158
      %p160 = scmp.eq.s32.totalorder %s29, 0
      %p161 = por %p159, %p160
      %s162 = ssub.s32 %s30, %s49
      %p163 = scmp.eq.s32.totalorder %s162, 0
      %s165 = sadd.s32 %s164, 1
      %s166 = scalar_select %p163, %s164, %s165
      %p169 = pneg %p163
      %p170 = scmp.eq.s32.totalorder %s23, 7
      %p171 = por %p169, %p170
      %p172 = scmp.ne.s32.totalorder %s164, %s167
      %p173 = scmp.eq.s32.totalorder %s23, 0
      %p174 = por %p172, %p173
      %p175 = scmp.ne.s32.totalorder %s164, %s167
      %p176 = scmp.eq.s32.totalorder %s28, 7
      %p177 = por %p175, %p176
      %p178 = scmp.ne.s32.totalorder %s167, %s168
      %p179 = scmp.eq.s32.totalorder %s28, 0
      %p180 = por %p178, %p179
      %p181 = scmp.ne.s32.totalorder %s167, %s168
      %p182 = scmp.eq.s32.totalorder %s29, 7
      %p183 = por %p181, %p182
      %p185 = scmp.ne.s32.totalorder %s168, %s184
      %p186 = scmp.eq.s32.totalorder %s29, 0
      %p187 = por %p185, %p186
      %s188 = ssub.s32 %s31, %s45
      %s189 = ssub.s32 %s30, %s49
      %s190 = sor.u32 %s188, %s189
      %p191 = scmp.eq.s32.totalorder %s190, 0
      %s193 = sadd.s32 %s192, 1
      %s194 = scalar_select %p191, %s192, %s193
      %p197 = pneg %p191
      %p198 = scmp.eq.s32.totalorder %s23, 7
      %p199 = por %p197, %p198
      %p200 = scmp.ne.s32.totalorder %s192, %s195
      %p201 = scmp.eq.s32.totalorder %s23, 0
      %p202 = por %p200, %p201
      %p203 = scmp.ne.s32.totalorder %s192, %s195
      %p204 = scmp.eq.s32.totalorder %s28, 7
      %p205 = por %p203, %p204
      %p206 = scmp.ne.s32.totalorder %s195, %s196
      %p207 = scmp.eq.s32.totalorder %s28, 0
      %p208 = por %p206, %p207
      %p209 = scmp.ne.s32.totalorder %s195, %s196
      %p210 = scmp.eq.s32.totalorder %s29, 7
      %p211 = por %p209, %p210
      %p213 = scmp.ne.s32.totalorder %s196, %s212
      %p214 = scmp.eq.s32.totalorder %s29, 0
      %p215 = por %p213, %p214
      %p216 = scmp.le.s32.totalorder 1, %s23
      %p217 = scmp.lt.s32.totalorder %s23, 9
      %p218 = pnand %p216, %p217
      %p219 = pneg %p218
      // Predicated region
      $region9: #{tpu_custom_call.1} parent=5 // pred_check
        _
      $region10: #{tpu_custom_call.1} parent=5 // pred_check_branch
        %221 = sbr.rel (%p218) target = $region12
      $region11: #{tpu_custom_call.1} parent=5 // pred_region
        %s222 = ssub.s32 %s23, 1
      $region12: #{tpu_custom_call.1} parent=5 // pred_fallthru
        _
      %p223 = scmp.lt.s32.totalorder %s23, 8
      // Predicated region
      $region13: #{tpu_custom_call.1} parent=5 // pred_check
        %p224 = pneg %p223
      $region14: #{tpu_custom_call.1} parent=5 // pred_check_branch
        %226 = sbr.rel (%p224) target = $region16
      $region15: #{tpu_custom_call.1} parent=5 // pred_region
        // Predicated region
        $region17: #{tpu_custom_call.1} parent=15 // pred_check
          %p227 = pneg %p64
        $region18: #{tpu_custom_call.1} parent=15 // pred_check_branch
          %229 = sbr.rel (%p227) target = $region20
        $region19: #{tpu_custom_call.1} parent=15 // pred_region
          %s230 = sand.u32 %s54, 1
          %s231 = scalar_lea.sflag [#allocation4], %s230
          %s232 = sand.u32 %s54, 1
          %s233 = smul.addr %s232, 16
          %s234 = scalar_lea.vmem [#allocation3], %s233
          %s235 = smul.u32 2, %s31
          %s237 = ssub.s32 256, 256
          %238 = vsyncadd %s231, %s237
          %s239 = smul.addr %s235, 2
          %s240 = sadd.s32 %s30, %s239
          %s241 = smul.addr %s240, 128
          %s242 = scalar_lea.hbm %s0, %s241
          %s243 = sshll.u32 %s234, 4
          %s244 = int_to_ptr.vmem [resolvable:$true] %s243
          %249 = dma.hbm_to_vmem [thread:$0]  %s242, 256, %s244, %s231, 256, 128, 8
        $region20: #{tpu_custom_call.1} parent=15 // pred_fallthru
          _
        // Predicated region
        $region21: #{tpu_custom_call.1} parent=15 // pred_check
          %p250 = pneg %p92
        $region22: #{tpu_custom_call.1} parent=15 // pred_check_branch
          %252 = sbr.rel (%p250) target = $region24
        $region23: #{tpu_custom_call.1} parent=15 // pred_region
          %s253 = sand.u32 %s23, 1
          %s254 = scalar_lea.sflag [#allocation7], %s253
          %s255 = sand.u32 %s82, 1
          %s256 = smul.addr %s255, 128
          %s257 = scalar_lea.vmem [#allocation6], %s256
          %s258 = smul.u32 2, %s32
          %s260 = ssub.s32 2048, 2048
          %261 = vsyncadd %s254, %s260
          %s262 = smul.addr %s30, 64
          %s263 = sadd.s32 %s258, %s262
          %s264 = smul.addr %s263, 64
          %s265 = scalar_lea.hbm %s1, %s264
          %s266 = sshll.u32 %s257, 4
          %s267 = int_to_ptr.vmem [resolvable:$true] %s266
          %272 = dma.hbm_to_vmem [thread:$0]  %s265, 2048, %s267, %s254, 256, 128, 8
        $region24: #{tpu_custom_call.1} parent=15 // pred_fallthru
          _
        // Predicated region
        $region25: #{tpu_custom_call.1} parent=15 // pred_check
          %p273 = pneg %p120
        $region26: #{tpu_custom_call.1} parent=15 // pred_check_branch
          %275 = sbr.rel (%p273) target = $region28
        $region27: #{tpu_custom_call.1} parent=15 // pred_region
          %s276 = sand.u32 %s23, 1
          %s277 = scalar_lea.sflag [#allocation7], %s276
          %s278 = sand.u32 %s110, 1
          %s279 = smul.addr %s278, 2
          %s280 = scalar_lea.vmem [#allocation8], %s279
          %s281 = smul.u32 2, %s32
          %s283 = ssub.s32 32, 32
          %284 = vsyncadd %s277, %s283
          %s285 = smul.addr %s30, 4
          %s286 = sadd.s32 %s281, %s285
          %s287 = smul.addr %s286, 16
          %s288 = scalar_lea.hbm %s2, %s287
          %s290 = sshll.u32 %s280, 4
          %s291 = int_to_ptr.vmem [resolvable:$true] %s290
          %293 = dma.hbm_to_vmem [thread:$0]  %s288, 32, %s291, %s277
        $region28: #{tpu_custom_call.1} parent=15 // pred_fallthru
          _
        // Predicated region
        $region29: #{tpu_custom_call.1} parent=15 // pred_check
          %p294 = pneg %p148
        $region30: #{tpu_custom_call.1} parent=15 // pred_check_branch
          %296 = sbr.rel (%p294) target = $region32
        $region31: #{tpu_custom_call.1} parent=15 // pred_region
          %s297 = sand.u32 %s138, 1
          %s298 = scalar_lea.sflag [#allocation10], %s297
          %s299 = sand.u32 %s138, 1
          %s300 = smul.addr %s299, 128
          %s301 = scalar_lea.vmem [#allocation9], %s300
          %s302 = smul.u32 32, %s32
          %s304 = ssub.s32 2048, 2048
          %305 = vsyncadd %s298, %s304
          %s306 = smul.addr %s30, 64
          %s307 = sadd.s32 %s302, %s306
          %s308 = smul.addr %s307, 64
          %s309 = scalar_lea.hbm %s3, %s308
          %s310 = sshll.u32 %s301, 4
          %s311 = int_to_ptr.vmem [resolvable:$true] %s310
          %316 = dma.hbm_to_vmem [thread:$0]  %s309, 2048, %s311, %s298, 64, 64, 4
        $region32: #{tpu_custom_call.1} parent=15 // pred_fallthru
          _
        // Predicated region
        $region33: #{tpu_custom_call.1} parent=15 // pred_check
          %p317 = pneg %p174
        $region34: #{tpu_custom_call.1} parent=15 // pred_check_branch
          %319 = sbr.rel (%p317) target = $region36
        $region35: #{tpu_custom_call.1} parent=15 // pred_region
          %p320 = scmp.lt.s32.totalorder %s30, 1
          %s321 = scalar_select %p320, %s30, 1
          %s322 = scalar_lea.vmem %s4, %s321
        $region36: #{tpu_custom_call.1} parent=15 // pred_fallthru
          _
      $region16: #{tpu_custom_call.1} parent=5 // pred_fallthru
        _
      %p323 = scmp.le.s32.totalorder 1, %s23
      %p324 = scmp.lt.s32.totalorder %s23, 9
      %p325 = pnand %p323, %p324
      %p326 = pneg %p325
      // Predicated region
      $region37: #{tpu_custom_call.1} parent=5 // pred_check
        _
      $region38: #{tpu_custom_call.1} parent=5 // pred_check_branch
        %328 = sbr.rel (%p325) target = $region40
      $region39: #{tpu_custom_call.1} parent=5 // pred_region
        %s329 = ssub.s32 %s23, 1
        %s330 = sand.u32 %s57, 1
        %s331 = scalar_lea.sflag [#allocation4], %s330
        %s332 = sand.u32 %s57, 1
        %s333 = smul.addr %s332, 16
        %s334 = scalar_lea.vmem [#allocation3], %s333
        // Predicated region
        $region41: #{tpu_custom_call.1} parent=39 // pred_check
          %p335 = pneg %p70
        $region42: #{tpu_custom_call.1} parent=39 // pred_check_branch
          %337 = sbr.rel (%p335) target = $region44
        $region43: #{tpu_custom_call.1} parent=39 // pred_region
          %338 = dma.done %s331, 256
        $region44: #{tpu_custom_call.1} parent=39 // pred_fallthru
          _
        %s339 = sand.u32 %s28, 1
        %s340 = scalar_lea.sflag [#allocation7], %s339
        %s341 = sand.u32 %s85, 1
        %s342 = smul.addr %s341, 128
        %s343 = scalar_lea.vmem [#allocation6], %s342
        // Predicated region
        $region45: #{tpu_custom_call.1} parent=39 // pred_check
          %p344 = pneg %p98
        $region46: #{tpu_custom_call.1} parent=39 // pred_check_branch
          %346 = sbr.rel (%p344) target = $region48
        $region47: #{tpu_custom_call.1} parent=39 // pred_region
          %347 = dma.done %s340, 2048
        $region48: #{tpu_custom_call.1} parent=39 // pred_fallthru
          _
        %s348 = sand.u32 %s28, 1
        %s349 = scalar_lea.sflag [#allocation7], %s348
        %s350 = sand.u32 %s113, 1
        %s351 = smul.addr %s350, 2
        %s352 = scalar_lea.vmem [#allocation8], %s351
        // Predicated region
        $region49: #{tpu_custom_call.1} parent=39 // pred_check
          %p353 = pneg %p126
        $region50: #{tpu_custom_call.1} parent=39 // pred_check_branch
          %355 = sbr.rel (%p353) target = $region52
        $region51: #{tpu_custom_call.1} parent=39 // pred_region
          %356 = dma.done %s349, 32
        $region52: #{tpu_custom_call.1} parent=39 // pred_fallthru
          _
        %s357 = sand.u32 %s141, 1
        %s358 = scalar_lea.sflag [#allocation10], %s357
        %s359 = sand.u32 %s141, 1
        %s360 = smul.addr %s359, 128
        %s361 = scalar_lea.vmem [#allocation9], %s360
        // Predicated region
        $region53: #{tpu_custom_call.1} parent=39 // pred_check
          %p362 = pneg %p154
        $region54: #{tpu_custom_call.1} parent=39 // pred_check_branch
          %364 = sbr.rel (%p362) target = $region56
        $region55: #{tpu_custom_call.1} parent=39 // pred_region
          %365 = dma.done %s358, 2048
        $region56: #{tpu_custom_call.1} parent=39 // pred_fallthru
          _
        %s366 = sand.u32 %s57, 1
        %s367 = scalar_lea.sflag [#allocation4], %s366
        %s368 = sand.u32 %s57, 1
        %s369 = smul.addr %s368, 16
        %s370 = scalar_lea.vmem [#allocation3], %s369
        %p371 = pneg %p70
        %p372 = pneg %p67
        %s373 = sand.u32 %s28, 1
        %s374 = scalar_lea.sflag [#allocation7], %s373
        %s375 = sand.u32 %s85, 1
        %s376 = smul.addr %s375, 128
        %s377 = scalar_lea.vmem [#allocation6], %s376
        %p378 = pneg %p98
        %p379 = pneg %p95
        %s380 = sand.u32 %s28, 1
        %s381 = scalar_lea.sflag [#allocation7], %s380
        %s382 = sand.u32 %s113, 1
        %s383 = smul.addr %s382, 2
        %s384 = scalar_lea.vmem [#allocation8], %s383
        %p385 = pneg %p126
        %p386 = pneg %p123
        %s387 = sand.u32 %s141, 1
        %s388 = scalar_lea.sflag [#allocation10], %s387
        %s389 = sand.u32 %s141, 1
        %s390 = smul.addr %s389, 128
        %s391 = scalar_lea.vmem [#allocation9], %s390
        %p392 = pneg %p154
        %p393 = pneg %p151
        %p394 = scmp.lt.s32.totalorder %s33, 1
        %s395 = scalar_select %p394, %s33, 1
        %s396 = scalar_lea.vmem %s4, %s395
        %p397 = pneg %p180
        %p398 = pneg %p177
        %p399 = pneg %p208
        %p400 = pneg %p205
        %s401 = sand.u32 %s195, 1
        %s402 = scalar_lea.sflag [#allocation5], %s401
        %s403 = sand.u32 %s195, 1
        %s404 = smul.addr %s403, 16
        %s405 = scalar_lea.vmem [#allocation11], %s404
        %s406 = smul.u32 2, %s34
        %s407 = smul.u32 2, %s35
        %s408 = smul.u32 2, %s35
        %s409 = smul.u32 32, %s35
        %p410 = scmp.lt.s32.totalorder %s33, 1
        %s411 = scalar_select %p410, %s33, 1
        %s412 = scalar_lea.vmem %s4, %s411
        %p414 = scmp.eq.s32.totalorder %s35, 0
        // Predicated region
        $region57: #{tpu_custom_call.1} parent=39 // pred_check
          %p415 = pneg %p414
        $region58: #{tpu_custom_call.1} parent=39 // pred_check_branch
          %417 = sbr.rel (%p415) target = $region60
        $region59: #{tpu_custom_call.1} parent=39 // pred_region
          %418 = vst [vmem:[#allocation2] sm:$0xff] 0.0
          %419 = vst [vmem:[#allocation2 + $0x8] sm:$0xff] 0.0
        $region60: #{tpu_custom_call.1} parent=39 // pred_fallthru
          _
        %v420 = vld [vmem:[%s334] sm:$0xff]
        %v421 = vld [vmem:[%s334 + $0x8] sm:$0xff]
        %v422 = vpack.c.bf16 %v421, %v420
        %v423 = vld [vmem:[%s343] sm:$0xff]
        %v424 = vld [vmem:[%s343 + $0x8] sm:$0xff]
        %v425 = vld [vmem:[%s343 + $0x10] sm:$0xff]
        %v426 = vld [vmem:[%s343 + $0x18] sm:$0xff]
        %v427 = vld [vmem:[%s343 + $0x20] sm:$0xff]
        %v428 = vld [vmem:[%s343 + $0x28] sm:$0xff]
        %v429 = vld [vmem:[%s343 + $0x30] sm:$0xff]
        %v430 = vld [vmem:[%s343 + $0x38] sm:$0xff]
        %v431 = vld [vmem:[%s343 + $0x40] sm:$0xff]
        %v432 = vld [vmem:[%s343 + $0x48] sm:$0xff]
        %v433 = vld [vmem:[%s343 + $0x50] sm:$0xff]
        %v434 = vld [vmem:[%s343 + $0x58] sm:$0xff]
        %v435 = vld [vmem:[%s343 + $0x60] sm:$0xff]
        %v436 = vld [vmem:[%s343 + $0x68] sm:$0xff]
        %v437 = vld [vmem:[%s343 + $0x70] sm:$0xff]
        %v438 = vld [vmem:[%s343 + $0x78] sm:$0xff]
        %v439 = vld [vmem:[%s352] sm:$0x3]
        %v441 = vlaneseq
        %v442 = vshrl.u32 %v441, 7
        %v443 = vsub.s32 0, %v442
        %v444 = vrot.slane %v439, %v443
        %v445 = vlaneseq
        %v446 = vshrl.u32 %v445, 7
        %v447 = vsub.s32 1, %v446
        %v448 = vrot.slane %v439, %v447
        %v467 = vunpack.c.l.b16 %v423
        %v468 = vunpack.c.h.b16 %v423
        %v469 = vunpack.c.l.b16 %v424
        %v470 = vunpack.c.h.b16 %v424
        %v471 = vunpack.c.l.b16 %v425
        %v472 = vunpack.c.h.b16 %v425
        %v473 = vunpack.c.l.b16 %v426
        %v474 = vunpack.c.h.b16 %v426
        %v475 = vunpack.c.l.b16 %v427
        %v476 = vunpack.c.h.b16 %v427
        %v477 = vunpack.c.l.b16 %v428
        %v478 = vunpack.c.h.b16 %v428
        %v479 = vunpack.c.l.b16 %v429
        %v480 = vunpack.c.h.b16 %v429
        %v481 = vunpack.c.l.b16 %v430
        %v482 = vunpack.c.h.b16 %v430
        %v483 = vunpack.c.l.b16 %v431
        %v484 = vunpack.c.h.b16 %v431
        %v485 = vunpack.c.l.b16 %v432
        %v486 = vunpack.c.h.b16 %v432
        %v487 = vunpack.c.l.b16 %v433
        %v488 = vunpack.c.h.b16 %v433
        %v489 = vunpack.c.l.b16 %v434
        %v490 = vunpack.c.h.b16 %v434
        %v491 = vunpack.c.l.b16 %v435
        %v492 = vunpack.c.h.b16 %v435
        %v493 = vunpack.c.l.b16 %v436
        %v494 = vunpack.c.h.b16 %v436
        %v495 = vunpack.c.l.b16 %v437
        %v496 = vunpack.c.h.b16 %v437
        %v497 = vunpack.c.l.b16 %v438
        %v498 = vunpack.c.h.b16 %v438
        %v499 = vpack.c.b16 %v469, %v467
        %v500 = vpack.c.b16 %v470, %v468
        %v501 = vpack.c.b16 %v473, %v471
        %v502 = vpack.c.b16 %v474, %v472
        %v503 = vpack.c.b16 %v477, %v475
        %v504 = vpack.c.b16 %v478, %v476
        %v505 = vpack.c.b16 %v481, %v479
        %v506 = vpack.c.b16 %v482, %v480
        %v507 = vpack.c.b16 %v485, %v483
        %v508 = vpack.c.b16 %v486, %v484
        %v509 = vpack.c.b16 %v489, %v487
        %v510 = vpack.c.b16 %v490, %v488
        %v511 = vpack.c.b16 %v493, %v491
        %v512 = vpack.c.b16 %v494, %v492
        %v513 = vpack.c.b16 %v497, %v495
        %v514 = vpack.c.b16 %v498, %v496
        %531 = vmatprep.subr.bf16.mxu0 %v500
        %532 = vmatpush1.bf16.msra.mxu0 %v499
        %533 = vmatprep.subr.bf16.mxu0 %v502
        %534 = vmatpush1.bf16.msra.mxu0 %v501
        %535 = vmatprep.subr.bf16.mxu0 %v504
        %536 = vmatpush1.bf16.msra.mxu0 %v503
        %537 = vmatprep.subr.bf16.mxu0 %v506
        %538 = vmatpush1.bf16.msra.mxu0 %v505
        %539 = vmatprep.subr.bf16.mxu0 %v508
        %540 = vmatpush1.bf16.msra.mxu0 %v507
        %541 = vmatprep.subr.bf16.mxu0 %v510
        %542 = vmatpush1.bf16.msra.mxu0 %v509
        %543 = vmatprep.subr.bf16.mxu0 %v512
        %544 = vmatpush1.bf16.msra.mxu0 %v511
        %545 = vmatprep.subr.bf16.mxu0 %v514
        %546 = vmatpush1.bf16.msra.mxu0 %v513
        %547 = vmatprep.subr.bf16.mxu0 0
        %548 = vmatpush1.bf16.msra.mxu0 0
        %549 = vmatprep.subr.bf16.mxu0 0
        %550 = vmatpush1.bf16.msra.mxu0 0
        %551 = vmatprep.subr.bf16.mxu0 0
        %552 = vmatpush1.bf16.msra.mxu0 0
        %553 = vmatprep.subr.bf16.mxu0 0
        %554 = vmatpush1.bf16.msra.mxu0 0
        %555 = vmatprep.subr.bf16.mxu0 0
        %556 = vmatpush1.bf16.msra.mxu0 0
        %557 = vmatprep.subr.bf16.mxu0 0
        %558 = vmatpush1.bf16.msra.mxu0 0
        %559 = vmatprep.subr.bf16.mxu0 0
        %560 = vmatpush1.bf16.msra.mxu0 0
        %561 = vmatprep.subr.bf16.mxu0 0
        %562 = vmatpush1.bf16.msra.mxu0 0
        %563 = vmatprep.mubr.bf16.mxu0 0
        %564 = vmatmul.mubr.bf16.gmra.mrb[0].mxu0 %v422
        %v565 = vpop.f32.mrb[0].mxu0
        %v566 = vadd.f32 %v444, %v565
        %v567 = vpop.f32.mrb[0].mxu0
        %v568 = vadd.f32 %v448, %v567
        %v569 = vpop.f32.mrb[0].mxu0
        %v570 = vadd.f32 %v444, %v569
        %v571 = vpop.f32.mrb[0].mxu0
        %v572 = vadd.f32 %v448, %v571
        %573 = vdwg.mxu0
        %v574 = vmax.f32 %v566, 0.0
        %v575 = vmax.f32 %v568, 0.0
        %v576 = vmax.f32 %v570, 0.0
        %v577 = vmax.f32 %v572, 0.0
        %v578 = vld [vmem:[#allocation2] sm:$0xff]
        %v579 = vld [vmem:[#allocation2 + $0x8] sm:$0xff]
        %v580 = vpack.c.bf16 %v576, %v574
        %v581 = vpack.c.bf16 %v577, %v575
        %v582 = vld [vmem:[%s361] sm:$0xf]
        %v583 = vld [vmem:[%s361 + $0x4] sm:$0xf]
        %v584 = vld [vmem:[%s361 + $0x8] sm:$0xf]
        %v585 = vld [vmem:[%s361 + $0xc] sm:$0xf]
        %v586 = vld [vmem:[%s361 + $0x10] sm:$0xf]
        %v587 = vld [vmem:[%s361 + $0x14] sm:$0xf]
        %v588 = vld [vmem:[%s361 + $0x18] sm:$0xf]
        %v589 = vld [vmem:[%s361 + $0x1c] sm:$0xf]
        %v590 = vld [vmem:[%s361 + $0x20] sm:$0xf]
        %v591 = vld [vmem:[%s361 + $0x24] sm:$0xf]
        %v592 = vld [vmem:[%s361 + $0x28] sm:$0xf]
        %v593 = vld [vmem:[%s361 + $0x2c] sm:$0xf]
        %v594 = vld [vmem:[%s361 + $0x30] sm:$0xf]
        %v595 = vld [vmem:[%s361 + $0x34] sm:$0xf]
        %v596 = vld [vmem:[%s361 + $0x38] sm:$0xf]
        %v597 = vld [vmem:[%s361 + $0x3c] sm:$0xf]
        %v598 = vld [vmem:[%s361 + $0x40] sm:$0xf]
        %v599 = vld [vmem:[%s361 + $0x44] sm:$0xf]
        %v600 = vld [vmem:[%s361 + $0x48] sm:$0xf]
        %v601 = vld [vmem:[%s361 + $0x4c] sm:$0xf]
        %v602 = vld [vmem:[%s361 + $0x50] sm:$0xf]
        %v603 = vld [vmem:[%s361 + $0x54] sm:$0xf]
        %v604 = vld [vmem:[%s361 + $0x58] sm:$0xf]
        %v605 = vld [vmem:[%s361 + $0x5c] sm:$0xf]
        %v606 = vld [vmem:[%s361 + $0x60] sm:$0xf]
        %v607 = vld [vmem:[%s361 + $0x64] sm:$0xf]
        %v608 = vld [vmem:[%s361 + $0x68] sm:$0xf]
        %v609 = vld [vmem:[%s361 + $0x6c] sm:$0xf]
        %v610 = vld [vmem:[%s361 + $0x70] sm:$0xf]
        %v611 = vld [vmem:[%s361 + $0x74] sm:$0xf]
        %v612 = vld [vmem:[%s361 + $0x78] sm:$0xf]
        %v613 = vld [vmem:[%s361 + $0x7c] sm:$0xf]
        %v646 = vunpack.c.l.b16 %v582
        %v647 = vunpack.c.l.b16 %v583
        %v648 = vunpack.c.l.b16 %v584
        %v649 = vunpack.c.l.b16 %v585
        %v650 = vunpack.c.l.b16 %v586
        %v651 = vunpack.c.l.b16 %v587
        %v652 = vunpack.c.l.b16 %v588
        %v653 = vunpack.c.l.b16 %v589
        %v654 = vunpack.c.l.b16 %v590
        %v655 = vunpack.c.l.b16 %v591
        %v656 = vunpack.c.l.b16 %v592
        %v657 = vunpack.c.l.b16 %v593
        %v658 = vunpack.c.l.b16 %v594
        %v659 = vunpack.c.l.b16 %v595
        %v660 = vunpack.c.l.b16 %v596
        %v661 = vunpack.c.l.b16 %v597
        %v662 = vunpack.c.l.b16 %v598
        %v663 = vunpack.c.l.b16 %v599
        %v664 = vunpack.c.l.b16 %v600
        %v665 = vunpack.c.l.b16 %v601
        %v666 = vunpack.c.l.b16 %v602
        %v667 = vunpack.c.l.b16 %v603
        %v668 = vunpack.c.l.b16 %v604
        %v669 = vunpack.c.l.b16 %v605
        %v670 = vunpack.c.l.b16 %v606
        %v671 = vunpack.c.l.b16 %v607
        %v672 = vunpack.c.l.b16 %v608
        %v673 = vunpack.c.l.b16 %v609
        %v674 = vunpack.c.l.b16 %v610
        %v675 = vunpack.c.l.b16 %v611
        %v676 = vunpack.c.l.b16 %v612
        %v677 = vunpack.c.l.b16 %v613
        %v678 = vpack.c.b16 %v647, %v646
        %v679 = vpack.c.b16 %v649, %v648
        %v680 = vpack.c.b16 %v651, %v650
        %v681 = vpack.c.b16 %v653, %v652
        %v682 = vpack.c.b16 %v655, %v654
        %v683 = vpack.c.b16 %v657, %v656
        %v684 = vpack.c.b16 %v659, %v658
        %v685 = vpack.c.b16 %v661, %v660
        %v686 = vpack.c.b16 %v663, %v662
        %v687 = vpack.c.b16 %v665, %v664
        %v688 = vpack.c.b16 %v667, %v666
        %v689 = vpack.c.b16 %v669, %v668
        %v690 = vpack.c.b16 %v671, %v670
        %v691 = vpack.c.b16 %v673, %v672
        %v692 = vpack.c.b16 %v675, %v674
        %v693 = vpack.c.b16 %v677, %v676
        %710 = vmatprep.subr.bf16.mxu0 0
        %711 = vmatpush1.bf16.msra.mxu0 %v678
        %712 = vmatprep.subr.bf16.mxu0 0
        %713 = vmatpush1.bf16.msra.mxu0 %v679
        %714 = vmatprep.subr.bf16.mxu0 0
        %715 = vmatpush1.bf16.msra.mxu0 %v680
        %716 = vmatprep.subr.bf16.mxu0 0
        %717 = vmatpush1.bf16.msra.mxu0 %v681
        %718 = vmatprep.subr.bf16.mxu0 0
        %719 = vmatpush1.bf16.msra.mxu0 %v682
        %720 = vmatprep.subr.bf16.mxu0 0
        %721 = vmatpush1.bf16.msra.mxu0 %v683
        %722 = vmatprep.subr.bf16.mxu0 0
        %723 = vmatpush1.bf16.msra.mxu0 %v684
        %724 = vmatprep.subr.bf16.mxu0 0
        %725 = vmatpush1.bf16.msra.mxu0 %v685
        %726 = vmatprep.subr.bf16.mxu0 0
        %727 = vmatpush1.bf16.msra.mxu0 %v686
        %728 = vmatprep.subr.bf16.mxu0 0
        %729 = vmatpush1.bf16.msra.mxu0 %v687
        %730 = vmatprep.subr.bf16.mxu0 0
        %731 = vmatpush1.bf16.msra.mxu0 %v688
        %732 = vmatprep.subr.bf16.mxu0 0
        %733 = vmatpush1.bf16.msra.mxu0 %v689
        %734 = vmatprep.subr.bf16.mxu0 0
        %735 = vmatpush1.bf16.msra.mxu0 %v690
        %736 = vmatprep.subr.bf16.mxu0 0
        %737 = vmatpush1.bf16.msra.mxu0 %v691
        %738 = vmatprep.subr.bf16.mxu0 0
        %739 = vmatpush1.bf16.msra.mxu0 %v692
        %740 = vmatprep.subr.bf16.mxu0 0
        %741 = vmatpush1.bf16.msra.mxu0 %v693
        %742 = vmatprep.mubr.bf16.mxu0 %v581
        %743 = vmatmul.mubr.bf16.gmra.mrb[0].mxu0 %v580
        %v744 = vpop.f32.mrb[0].mxu0
        %v745 = vadd.f32 0.0, %v744
        %v746 = vpop.f32.mrb[0].mxu0
        %v747 = vpop.f32.mrb[0].mxu0
        %v748 = vadd.f32 0.0, %v747
        %v749 = vpop.f32.mrb[0].mxu0
        %750 = vdwg.mxu0
        %v751 = vadd.f32 %v578, %v745
        %v752 = vadd.f32 %v579, %v748
        %753 = vst [vmem:[#allocation2] sm:$0xff] %v751
        %754 = vst [vmem:[#allocation2 + $0x8] sm:$0xff] %v752
        %p755 = scmp.eq.s32.totalorder %s35, 1
        // Predicated region
        $region61: #{tpu_custom_call.1} parent=39 // pred_check
          %p756 = pneg %p755
        $region62: #{tpu_custom_call.1} parent=39 // pred_check_branch
          %758 = sbr.rel (%p756) target = $region64
        $region63: #{tpu_custom_call.1} parent=39 // pred_region
          %v759 = vld [vmem:[#allocation2] sm:$0xff]
          %v760 = vld [vmem:[#allocation2 + $0x8] sm:$0xff]
          %v761 = vld [vmem:[%s412] sm:$0x1]
          %v763 = vlaneseq
          %v764 = vshrl.u32 %v763, 7
          %v765 = vsub.s32 0, %v764
          %v766 = vrot.slane %v761, %v765
          %v768 = vadd.f32 %v759, %v766
          %v769 = vadd.f32 %v760, %v766
          %770 = vst [vmem:[%s405] sm:$0xff] %v768
          %771 = vst [vmem:[%s405 + $0x8] sm:$0xff] %v769
        $region64: #{tpu_custom_call.1} parent=39 // pred_fallthru
          _
        %s772 = sand.u32 %s195, 1
        %s773 = scalar_lea.sflag [#allocation5], %s772
        %s774 = sand.u32 %s195, 1
        %s775 = smul.addr %s774, 16
        %s776 = scalar_lea.vmem [#allocation11], %s775
        // Predicated region
        $region65: #{tpu_custom_call.1} parent=39 // pred_check
          %p777 = pneg %p205
        $region66: #{tpu_custom_call.1} parent=39 // pred_check_branch
          %779 = sbr.rel (%p777) target = $region68
        $region67: #{tpu_custom_call.1} parent=39 // pred_region
          %s781 = ssub.s32 256, 256
          %782 = vsyncadd %s773, %s781
          %s783 = smul.addr %s33, 2
          %s784 = smul.addr %s34, 4
          %s785 = sadd.s32 %s783, %s784
          %s786 = smul.addr %s785, 128
          %s787 = scalar_lea.hbm %s5, %s786
          %s788 = sshll.u32 %s776, 4
          %s789 = int_to_ptr.vmem [resolvable:$true] %s788
          %794 = dma.vmem_to_hbm [thread:$0]  %s789, 256, %s787, %s773, 128, 128, 8
        $region68: #{tpu_custom_call.1} parent=39 // pred_fallthru
          _
      $region40: #{tpu_custom_call.1} parent=5 // pred_fallthru
        _
      %p795 = scmp.le.s32.totalorder 2, %s23
      // Predicated region
      $region69: #{tpu_custom_call.1} parent=5 // pred_check
        %p796 = pneg %p795
      $region70: #{tpu_custom_call.1} parent=5 // pred_check_branch
        %798 = sbr.rel (%p796) target = $region72
      $region71: #{tpu_custom_call.1} parent=5 // pred_region
        %s799 = ssub.s32 %s23, 2
        // Predicated region
        $region73: #{tpu_custom_call.1} parent=71 // pred_check
          %p800 = pneg %p211
        $region74: #{tpu_custom_call.1} parent=71 // pred_check_branch
          %802 = sbr.rel (%p800) target = $region76
        $region75: #{tpu_custom_call.1} parent=71 // pred_region
          %s803 = sand.u32 %s196, 1
          %s804 = scalar_lea.sflag [#allocation5], %s803
          %s805 = sand.u32 %s196, 1
          %s806 = smul.addr %s805, 16
          %s807 = scalar_lea.vmem [#allocation11], %s806
          %808 = dma.done %s804, 256
        $region76: #{tpu_custom_call.1} parent=71 // pred_fallthru
          _
      $region72: #{tpu_custom_call.1} parent=5 // pred_fallthru
        _
    $region6: #{tpu_custom_call.1} parent=1 // loop_footer
      %s27 = sadd.s32 1, %s23
    $region7: #{tpu_custom_call.1} parent=1 // loop_footer_branch
      %22 = sbr.rel target = $region3
    $region8: #{tpu_custom_call.1} parent=1 // loop_exit
      _
    %809 = vsyncpa [#allocation4], 1
    %s810 = scalar_lea.sflag [#allocation4], 1
    %811 = vsyncpa %s810, 1
    %812 = vsyncpa [#allocation7], 1
    %s813 = scalar_lea.sflag [#allocation7], 1
    %814 = vsyncpa %s813, 1
    %815 = vsyncpa [#allocation10], 1
    %s816 = scalar_lea.sflag [#allocation10], 1
    %817 = vsyncpa %s816, 1
    %818 = vsyncpa [#allocation5], 1
    %s819 = scalar_lea.sflag [#allocation5], 1
    %820 = vsyncpa %s819, 1

</llo_original>
